<compile_context>
chip_gen: v7x
topology: tpu7x:2x2x1
jax: 0.10.0
libtpu: 0.0.40
codegen_flags: <defaults>
</compile_context>

<pallas_src>
import functools

import jax
import jax.numpy as jnp
from jax.experimental import pallas as pl
from jax.experimental.pallas import tpu as pltpu


# ----------------------------------------------------------------------------
# Pallas kernel: full MLP forward for one tile of rows, feature-major layout.
#   h = relu(W_l @ h + b_l)   for all hidden layers      (h is (feat, tile))
#   y = tanh(W_L @ h + b_L)   for the last layer
# Built once per layer count (the layer structure is static).
# ----------------------------------------------------------------------------
def _make_mlp_kernel(num_layers):
    def kernel(*refs):
        x_ref = refs[0]                          # (d_in, tile)  lane-dense
        o_ref = refs[-1]                         # (out_ch, tile)
        wb_refs = refs[1:-1]                     # (w0, b0, w1, b1, ..., wL, bL)

        h = x_ref[...].astype(jnp.float32)
        for li in range(num_layers):
            w = wb_refs[2 * li][...]             # (out_c, in_c)
            b = wb_refs[2 * li + 1][...]         # (out_c, 1) — broadcasts on lanes
            h = jnp.dot(w, h, preferred_element_type=jnp.float32) + b
            if li < num_layers - 1:
                h = jnp.maximum(h, 0.0)          # ReLU (VPU)
            else:
                h = jnp.tanh(h)                  # Tanh (EUP)
        o_ref[...] = h.astype(o_ref.dtype)

    return kernel


# ----------------------------------------------------------------------------
# Weight-norm folding — do this ONCE per parameter update (not per forward).
# PyTorch weight_norm (dim=0): W = g * v / ||v||, norm over the input dim per
# output row.  Kept as (out, in) plus bias (out, 1) for the feature-major
# kernel (h = W @ h + b).
# ----------------------------------------------------------------------------
def prepare_weight_norm_params(params):
    eff = []
    for v, g, b in params:
        v32 = v.astype(jnp.float32)
        norm = jnp.sqrt(jnp.sum(v32 * v32, axis=1, keepdims=True))   # (out, 1)
        w = g.astype(jnp.float32)[:, None] * v32 / norm              # (out, in)
        eff.append((w, b.astype(jnp.float32)[:, None]))              # (out,in), (out,1)
    return eff


def _round_up(x, m):
    return (x + m - 1) // m * m


# ----------------------------------------------------------------------------
# Wrapper: small-N fast path, lane-dense tiling + pallas_call
# ----------------------------------------------------------------------------
@functools.partial(jax.jit, static_argnames=("tile_n", "small_n_threshold"))
def mlp_forward(x, eff_params, *, tile_n=16384, small_n_threshold=1024):
    """Forward pass of the weight-normed MLP on pre-folded params.

    x:          (N, input_ch) float32
    eff_params: list of (W (out,in), b (out,1)) from prepare_weight_norm_params
    """
    n, d_in = x.shape
    num_layers = len(eff_params)
    out_ch = eff_params[-1][0].shape[0]

    # Small-N fast path: a single fused XLA dot chain beats the pallas_call
    # launch + pipeline prologue for tiny problems.
    if n < small_n_threshold:
        h = x.astype(jnp.float32)
        for li, (w, b) in enumerate(eff_params):
            h = h @ w.T + b[:, 0][None, :]
            h = jnp.maximum(h, 0.0) if li < num_layers - 1 else jnp.tanh(h)
        return h

    # Lane-dense layout: N rides on the 128-lane axis.
    LANE = 128
    # >= 2 grid steps so the "parallel" axis feeds both v7x TensorCores;
    # balanced tiles keep the ragged-N padding under 128 rows per tile.
    num_tiles = max(pl.cdiv(n, tile_n), 2)
    tile = _round_up(pl.cdiv(n, num_tiles), LANE)
    n_pad = tile * num_tiles

    x_t = x.astype(jnp.float32).T                        # (d_in, N)
    if n_pad != n:
        x_t = jnp.pad(x_t, ((0, 0), (0, n_pad - n)))     # zero-pad dead columns

    in_specs = [pl.BlockSpec((d_in, tile), lambda i: (0, i))]        # x^T tile
    flat_wb = []
    for w, b in eff_params:
        in_specs.append(pl.BlockSpec(w.shape, lambda i: (0, 0)))     # full weight
        in_specs.append(pl.BlockSpec(b.shape, lambda i: (0, 0)))     # full bias
        flat_wb.extend([w, b])
    out_spec = pl.BlockSpec((out_ch, tile), lambda i: (0, i))        # y^T tile

    out_t = pl.pallas_call(
        _make_mlp_kernel(num_layers),
        out_shape=jax.ShapeDtypeStruct((out_ch, n_pad), jnp.float32),
        grid_spec=pltpu.PrefetchScalarGridSpec(
            num_scalar_prefetch=0,
            grid=(num_tiles,),
            in_specs=in_specs,
            out_specs=out_spec,
        ),
        compiler_params=pltpu.CompilerParams(
            dimension_semantics=("parallel",),       # shards across v7x cores
            vmem_limit_bytes=48 * 1024 * 1024,       # safe on 64 MiB v7x VMEM
        ),
    )(x_t, *flat_wb)

    return out_t[:, :n].T                              # back to (N, out_ch)


# ----------------------------------------------------------------------------
# Deterministic synthetic parameter init (weight_norm parameterization)
# ----------------------------------------------------------------------------
def init_params(key, input_ch, out_ch, hidden_ch):
    params = []
    in_c = input_ch
    dims = list(hidden_ch) + [out_ch]
    for out_c in dims:
        key, k_v, k_g, k_b = jax.random.split(key, 4)
        v = jax.random.normal(k_v, (out_c, in_c), jnp.float32) * 0.5
        g = jax.random.uniform(k_g, (out_c,), jnp.float32, 0.5, 1.5)
        b = jax.random.normal(k_b, (out_c,), jnp.float32) * 0.1
        params.append((v, g, b))
        in_c = out_c
    return params


# Pure-JAX reference (mirrors the PyTorch MLP forward semantics exactly)
def reference_forward(x, params):
    n_layers = len(params)
    for li, (v, g, b) in enumerate(params):
        norm = jnp.sqrt(jnp.sum(v ** 2, axis=1, keepdims=True))
        w = g[:, None] * v / norm
        x = x @ w.T + b
        if li < n_layers - 1:
            x = jnp.maximum(x, 0.0)    # ReLU
        else:
            x = jnp.tanh(x)            # Tanh
    return x


if __name__ == "__main__":
    # Small shapes consistent with the module: X: (N, input_ch); hidden_ch=[32, 32]
    N = 256
    input_ch = 9
    out_ch = 3
    hidden_ch = [32, 32]

    key = jax.random.PRNGKey(0)
    key, kx = jax.random.split(key)
    x = jax.random.normal(kx, (N, input_ch), jnp.float32)

    params = init_params(key, input_ch, out_ch, hidden_ch)

    # Weight-norm folding hoisted out of the hot path (done once per param set).
    eff_params = prepare_weight_norm_params(params)
    ref = reference_forward(x, params)

    # Pallas path (force past the small-N fast path so the kernel is exercised;
    # N=256 -> grid of 2 tiles of 128 lanes each).
    out = jax.block_until_ready(mlp_forward(x, eff_params, small_n_threshold=0))
    assert out.shape == (N, out_ch)
    assert jnp.allclose(out, ref, atol=1e-4, rtol=1e-4), "mismatch (pallas) vs reference"

    # Small-N fast path (default threshold) should also match.
    out_fast = jax.block_until_ready(mlp_forward(x, eff_params))
    assert jnp.allclose(out_fast, ref, atol=1e-4, rtol=1e-4), "mismatch (fast path) vs reference"

    # Ragged / multi-tile Pallas path (N not a multiple of the lane tile).
    N2 = 300
    key, kx2 = jax.random.split(key)
    x2 = jax.random.normal(kx2, (N2, input_ch), jnp.float32)
    out2 = jax.block_until_ready(
        mlp_forward(x2, eff_params, tile_n=128, small_n_threshold=0))
    ref2 = reference_forward(x2, params)
    assert out2.shape == (N2, out_ch)
    assert jnp.allclose(out2, ref2, atol=1e-4, rtol=1e-4), "mismatch (ragged) vs reference"

    print("KERNEL_OK")
</pallas_src>

<mosaic_0001>
module attributes {stable_mosaic.version = 11 : i64} {
  func.func @kernel(%arg0: i32, %arg1: memref<9x128xf32, #tpu.memory_space<vmem>>, %arg2: memref<32x9xf32, #tpu.memory_space<vmem>>, %arg3: memref<32x1xf32, #tpu.memory_space<vmem>>, %arg4: memref<32x32xf32, #tpu.memory_space<vmem>>, %arg5: memref<32x1xf32, #tpu.memory_space<vmem>>, %arg6: memref<3x32xf32, #tpu.memory_space<vmem>>, %arg7: memref<3x1xf32, #tpu.memory_space<vmem>>, %arg8: memref<3x128xf32, #tpu.memory_space<vmem>>) attributes {dimension_semantics = [#tpu.dimension_semantics<parallel>], iteration_bounds = array<i64: 2>, scalar_prefetch = 0 : i64, scratch_operands = 0 : i64, tpu.core_type = #tpu.core_type<tc>, window_params = [{transform_indices = @transform_0, window_bounds = array<i64: 9, 128>}, {pipeline_mode = #tpu.pipeline_mode<synchronous>, transform_indices = @transform_1, window_bounds = array<i64: 32, 9>}, {pipeline_mode = #tpu.pipeline_mode<synchronous>, transform_indices = @transform_2, window_bounds = array<i64: 32, 1>}, {pipeline_mode = #tpu.pipeline_mode<synchronous>, transform_indices = @transform_3, window_bounds = array<i64: 32, 32>}, {pipeline_mode = #tpu.pipeline_mode<synchronous>, transform_indices = @transform_4, window_bounds = array<i64: 32, 1>}, {pipeline_mode = #tpu.pipeline_mode<synchronous>, transform_indices = @transform_5, window_bounds = array<i64: 3, 32>}, {pipeline_mode = #tpu.pipeline_mode<synchronous>, transform_indices = @transform_6, window_bounds = array<i64: 3, 1>}, {transform_indices = @transform_7, window_bounds = array<i64: 3, 128>}]} {
    %c0 = arith.constant 0 : index
    %c0_0 = arith.constant 0 : index
    %0 = vector.load %arg1[%c0, %c0_0] : memref<9x128xf32, #tpu.memory_space<vmem>>, vector<9x128xf32>
    %c0_1 = arith.constant 0 : index
    %c0_2 = arith.constant 0 : index
    %1 = vector.load %arg2[%c0_1, %c0_2] : memref<32x9xf32, #tpu.memory_space<vmem>>, vector<32x9xf32>
    %c0_3 = arith.constant 0 : index
    %c0_4 = arith.constant 0 : index
    %2 = vector.load %arg3[%c0_3, %c0_4] : memref<32x1xf32, #tpu.memory_space<vmem>>, vector<32x1xf32>
    %cst = arith.constant dense<0.000000e+00> : vector<32x128xf32>
    %3 = tpu.matmul %1, %0, %cst {dimension_numbers = #tpu.dot_dimension_numbers<[1], [0], [0], [1], [0, 0, 1, 1], [], []>} : vector<32x9xf32>, vector<9x128xf32>, vector<32x128xf32> -> vector<32x128xf32>
    %4 = vector.broadcast %2 : vector<32x1xf32> to vector<32x128xf32>
    %5 = arith.addf %3, %4 : vector<32x128xf32>
    %cst_5 = arith.constant 0.000000e+00 : f32
    %6 = vector.broadcast %cst_5 : f32 to vector<32x128xf32>
    %7 = arith.maximumf %5, %6 : vector<32x128xf32>
    %c0_6 = arith.constant 0 : index
    %c0_7 = arith.constant 0 : index
    %8 = vector.load %arg4[%c0_6, %c0_7] : memref<32x32xf32, #tpu.memory_space<vmem>>, vector<32x32xf32>
    %c0_8 = arith.constant 0 : index
    %c0_9 = arith.constant 0 : index
    %9 = vector.load %arg5[%c0_8, %c0_9] : memref<32x1xf32, #tpu.memory_space<vmem>>, vector<32x1xf32>
    %cst_10 = arith.constant dense<0.000000e+00> : vector<32x128xf32>
    %10 = tpu.matmul %8, %7, %cst_10 {dimension_numbers = #tpu.dot_dimension_numbers<[1], [0], [0], [1], [0, 0, 1, 1], [], []>} : vector<32x32xf32>, vector<32x128xf32>, vector<32x128xf32> -> vector<32x128xf32>
    %11 = vector.broadcast %9 : vector<32x1xf32> to vector<32x128xf32>
    %12 = arith.addf %10, %11 : vector<32x128xf32>
    %cst_11 = arith.constant 0.000000e+00 : f32
    %13 = vector.broadcast %cst_11 : f32 to vector<32x128xf32>
    %14 = arith.maximumf %12, %13 : vector<32x128xf32>
    %c0_12 = arith.constant 0 : index
    %c0_13 = arith.constant 0 : index
    %15 = vector.load %arg6[%c0_12, %c0_13] : memref<3x32xf32, #tpu.memory_space<vmem>>, vector<3x32xf32>
    %c0_14 = arith.constant 0 : index
    %c0_15 = arith.constant 0 : index
    %16 = vector.load %arg7[%c0_14, %c0_15] : memref<3x1xf32, #tpu.memory_space<vmem>>, vector<3x1xf32>
    %cst_16 = arith.constant dense<0.000000e+00> : vector<3x128xf32>
    %17 = tpu.matmul %15, %14, %cst_16 {dimension_numbers = #tpu.dot_dimension_numbers<[1], [0], [0], [1], [0, 0, 1, 1], [], []>} : vector<3x32xf32>, vector<32x128xf32>, vector<3x128xf32> -> vector<3x128xf32>
    %18 = vector.broadcast %16 : vector<3x1xf32> to vector<3x128xf32>
    %19 = arith.addf %17, %18 : vector<3x128xf32>
    %20 = math.tanh %19 : vector<3x128xf32>
    %c0_17 = arith.constant 0 : index
    %c0_18 = arith.constant 0 : index
    %21 = vector.load %arg8[%c0_17, %c0_18] : memref<3x128xf32, #tpu.memory_space<vmem>>, vector<3x128xf32>
    tpu.vector_store %arg8[%c0_17, %c0_18], %20 {strides = array<i32>} : memref<3x128xf32, #tpu.memory_space<vmem>>, vector<3x128xf32>,
    return
  }
  func.func @transform_0(%arg0: i32) -> (i32, i32) {
    %c0_i32 = arith.constant 0 : i32
    %c0_i32_0 = arith.constant 0 : i32
    return %c0_i32, %arg0 : i32, i32
  }
  func.func @transform_1(%arg0: i32) -> (i32, i32) {
    %c0_i32 = arith.constant 0 : i32
    %c0_i32_0 = arith.constant 0 : i32
    %c0_i32_1 = arith.constant 0 : i32
    return %c0_i32, %c0_i32_0 : i32, i32
  }
  func.func @transform_2(%arg0: i32) -> (i32, i32) {
    %c0_i32 = arith.constant 0 : i32
    %c0_i32_0 = arith.constant 0 : i32
    %c0_i32_1 = arith.constant 0 : i32
    return %c0_i32, %c0_i32_0 : i32, i32
  }
  func.func @transform_3(%arg0: i32) -> (i32, i32) {
    %c0_i32 = arith.constant 0 : i32
    %c0_i32_0 = arith.constant 0 : i32
    %c0_i32_1 = arith.constant 0 : i32
    return %c0_i32, %c0_i32_0 : i32, i32
  }
  func.func @transform_4(%arg0: i32) -> (i32, i32) {
    %c0_i32 = arith.constant 0 : i32
    %c0_i32_0 = arith.constant 0 : i32
    %c0_i32_1 = arith.constant 0 : i32
    return %c0_i32, %c0_i32_0 : i32, i32
  }
  func.func @transform_5(%arg0: i32) -> (i32, i32) {
    %c0_i32 = arith.constant 0 : i32
    %c0_i32_0 = arith.constant 0 : i32
    %c0_i32_1 = arith.constant 0 : i32
    return %c0_i32, %c0_i32_0 : i32, i32
  }
  func.func @transform_6(%arg0: i32) -> (i32, i32) {
    %c0_i32 = arith.constant 0 : i32
    %c0_i32_0 = arith.constant 0 : i32
    %c0_i32_1 = arith.constant 0 : i32
    return %c0_i32, %c0_i32_0 : i32, i32
  }
  func.func @transform_7(%arg0: i32) -> (i32, i32) {
    %c0_i32 = arith.constant 0 : i32
    %c0_i32_0 = arith.constant 0 : i32
    return %c0_i32, %arg0 : i32, i32
  }
}

</mosaic_0001>

<llo_original>
// kernel: mlp_forward.1
$region0: #{mlp_forward.1}
  #allocation0 [shape = 'u32[]', space=smem, size = 0x4, offset = 0x4, fixed_abs, tag = 'smem constant byte address 0x4 - core index']
  #allocation1 [shape = 'u32[144,128]{1,0:T(1,128)}', space=vmem, size = 0x12000, scoped, tag = 'internal scratch']
  %s0 = inlined_call_operand.vmem [shape: f32[9,256], index: 0, kind: input, shape index: {}]
  %s1 = inlined_call_operand.vmem [shape: f32[32,9], index: 1, kind: input, shape index: {}]
  %s2 = inlined_call_operand.vmem [shape: f32[32,1], index: 2, kind: input, shape index: {}]
  %s3 = inlined_call_operand.vmem [shape: f32[32,32], index: 3, kind: input, shape index: {}]
  %s4 = inlined_call_operand.vmem [shape: f32[32,1], index: 4, kind: input, shape index: {}]
  %s5 = inlined_call_operand.vmem [shape: f32[3,32], index: 5, kind: input, shape index: {}]
  %s6 = inlined_call_operand.vmem [shape: f32[3,1], index: 6, kind: input, shape index: {}]
  %s7 = inlined_call_operand.hbm [shape: f32[3,256], index: 7, kind: output, shape index: {}]
  %s8 = sld [smem:[#allocation0]]
  $region99: #{mlp_forward.1} parent=0
    _
  %s10 = ssub.s32 1, %s8
  %s11 = scalar_select 0, %s10, %s8
  $region1: #{mlp_forward.1} parent=0
    #allocation2 [shape = 'u8[16384]{0}', space=vmem, size = 0x4000, scoped, tag = 'input window, operand 0']
    #allocation3 [shape = 'u8[4096]{0}', space=vmem, size = 0x1000, scoped, tag = 'output window, operand 0']
    #allocation4 [shape = 's32[2]{0}', space=sflag, size = 0x8, scoped, tag = 'scoped memory for mlp_forward.1']
    %12 = vsyncpa [#allocation4], 0
    %s13 = scalar_lea.sflag [#allocation4], 1
    %14 = vsyncpa %s13, 0
    loop: start=0, step=1, limit=4
    $region2: #{mlp_forward.1} parent=1 // loop_pre_header
      _
    $region3: #{mlp_forward.1} parent=1 // loop_header
      %s16 = sphi 0, %s20
      %p17 = scmp.ge.s32.totalorder %s16, 4
      %s26 = sphi 0, %s28
      %s29 = sphi 0, %s26
      %s30 = sphi 0, %s29
      %s46 = sphi 0, %s30
      %s50 = sphi 0, %s50
      %s52 = sphi 0, %s50
      %s53 = sphi 0, %s52
      %s67 = sphi 0, %s53
      %s71 = sphi 0, %s71
      %s73 = sphi 0, %s71
      %s74 = sphi 0, %s73
      %s88 = sphi 0, %s74
      %s92 = sphi 0, %s92
      %s94 = sphi 0, %s92
      %s95 = sphi 0, %s94
      %s109 = sphi 0, %s95
      %s113 = sphi 0, %s113
      %s115 = sphi 0, %s113
      %s116 = sphi 0, %s115
      %s130 = sphi 0, %s116
      %s134 = sphi 0, %s134
      %s136 = sphi 0, %s134
      %s137 = sphi 0, %s136
      %s151 = sphi 0, %s137
      %s155 = sphi 0, %s155
      %s157 = sphi 0, %s155
      %s158 = sphi 0, %s157
      %s172 = sphi 0, %s158
      %s178 = sphi 0, %s180
      %s181 = sphi 0, %s178
      %s182 = sphi 0, %s181
      %s198 = sphi 0, %s182
    $region4: #{mlp_forward.1} parent=1 // loop_header_branch
      %19 = sbr.rel (%p17) target = $region8
    $region5: #{mlp_forward.1} parent=1 // loop_body
      %s21 = ssub.s32 %s16, 1
      %s22 = ssub.s32 %s16, 2
      %s23 = sadd.s32 %s16, 1
      %s24 = ssub.s32 %s16, %s23
      %p25 = scmp.eq.s32.totalorder %s24, 0
      %s27 = sadd.s32 %s26, 1
      %s28 = scalar_select %p25, %s26, %s27
      %p31 = pneg %p25
      %p32 = scmp.eq.s32.totalorder %s16, 1
      %p33 = por %p31, %p32
      %p34 = scmp.ne.s32.totalorder %s26, %s29
      %p35 = scmp.eq.s32.totalorder %s16, 0
      %p36 = por %p34, %p35
      %p37 = scmp.ne.s32.totalorder %s26, %s29
      %p38 = scmp.eq.s32.totalorder %s21, 1
      %p39 = por %p37, %p38
      %p40 = scmp.ne.s32.totalorder %s29, %s30
      %p41 = scmp.eq.s32.totalorder %s21, 0
      %p42 = por %p40, %p41
      %p43 = scmp.ne.s32.totalorder %s29, %s30
      %p44 = scmp.eq.s32.totalorder %s22, 1
      %p45 = por %p43, %p44
      %p47 = scmp.ne.s32.totalorder %s30, %s46
      %p48 = scmp.eq.s32.totalorder %s22, 0
      %p49 = por %p47, %p48
      %s51 = sadd.s32 %s50, 1
      %p54 = scmp.eq.s32.totalorder %s16, 1
      %p55 = scmp.ne.s32.totalorder %s50, %s52
      %p56 = scmp.eq.s32.totalorder %s16, 0
      %p57 = por %p55, %p56
      %p58 = scmp.ne.s32.totalorder %s50, %s52
      %p59 = scmp.eq.s32.totalorder %s21, 1
      %p60 = por %p58, %p59
      %p61 = scmp.ne.s32.totalorder %s52, %s53
      %p62 = scmp.eq.s32.totalorder %s21, 0
      %p63 = por %p61, %p62
      %p64 = scmp.ne.s32.totalorder %s52, %s53
      %p65 = scmp.eq.s32.totalorder %s22, 1
      %p66 = por %p64, %p65
      %p68 = scmp.ne.s32.totalorder %s53, %s67
      %p69 = scmp.eq.s32.totalorder %s22, 0
      %p70 = por %p68, %p69
      %s72 = sadd.s32 %s71, 1
      %p75 = scmp.eq.s32.totalorder %s16, 1
      %p76 = scmp.ne.s32.totalorder %s71, %s73
      %p77 = scmp.eq.s32.totalorder %s16, 0
      %p78 = por %p76, %p77
      %p79 = scmp.ne.s32.totalorder %s71, %s73
      %p80 = scmp.eq.s32.totalorder %s21, 1
      %p81 = por %p79, %p80
      %p82 = scmp.ne.s32.totalorder %s73, %s74
      %p83 = scmp.eq.s32.totalorder %s21, 0
      %p84 = por %p82, %p83
      %p85 = scmp.ne.s32.totalorder %s73, %s74
      %p86 = scmp.eq.s32.totalorder %s22, 1
      %p87 = por %p85, %p86
      %p89 = scmp.ne.s32.totalorder %s74, %s88
      %p90 = scmp.eq.s32.totalorder %s22, 0
      %p91 = por %p89, %p90
      %s93 = sadd.s32 %s92, 1
      %p96 = scmp.eq.s32.totalorder %s16, 1
      %p97 = scmp.ne.s32.totalorder %s92, %s94
      %p98 = scmp.eq.s32.totalorder %s16, 0
      %p99 = por %p97, %p98
      %p100 = scmp.ne.s32.totalorder %s92, %s94
      %p101 = scmp.eq.s32.totalorder %s21, 1
      %p102 = por %p100, %p101
      %p103 = scmp.ne.s32.totalorder %s94, %s95
      %p104 = scmp.eq.s32.totalorder %s21, 0
      %p105 = por %p103, %p104
      %p106 = scmp.ne.s32.totalorder %s94, %s95
      %p107 = scmp.eq.s32.totalorder %s22, 1
      %p108 = por %p106, %p107
      %p110 = scmp.ne.s32.totalorder %s95, %s109
      %p111 = scmp.eq.s32.totalorder %s22, 0
      %p112 = por %p110, %p111
      %s114 = sadd.s32 %s113, 1
      %p117 = scmp.eq.s32.totalorder %s16, 1
      %p118 = scmp.ne.s32.totalorder %s113, %s115
      %p119 = scmp.eq.s32.totalorder %s16, 0
      %p120 = por %p118, %p119
      %p121 = scmp.ne.s32.totalorder %s113, %s115
      %p122 = scmp.eq.s32.totalorder %s21, 1
      %p123 = por %p121, %p122
      %p124 = scmp.ne.s32.totalorder %s115, %s116
      %p125 = scmp.eq.s32.totalorder %s21, 0
      %p126 = por %p124, %p125
      %p127 = scmp.ne.s32.totalorder %s115, %s116
      %p128 = scmp.eq.s32.totalorder %s22, 1
      %p129 = por %p127, %p128
      %p131 = scmp.ne.s32.totalorder %s116, %s130
      %p132 = scmp.eq.s32.totalorder %s22, 0
      %p133 = por %p131, %p132
      %s135 = sadd.s32 %s134, 1
      %p138 = scmp.eq.s32.totalorder %s16, 1
      %p139 = scmp.ne.s32.totalorder %s134, %s136
      %p140 = scmp.eq.s32.totalorder %s16, 0
      %p141 = por %p139, %p140
      %p142 = scmp.ne.s32.totalorder %s134, %s136
      %p143 = scmp.eq.s32.totalorder %s21, 1
      %p144 = por %p142, %p143
      %p145 = scmp.ne.s32.totalorder %s136, %s137
      %p146 = scmp.eq.s32.totalorder %s21, 0
      %p147 = por %p145, %p146
      %p148 = scmp.ne.s32.totalorder %s136, %s137
      %p149 = scmp.eq.s32.totalorder %s22, 1
      %p150 = por %p148, %p149
      %p152 = scmp.ne.s32.totalorder %s137, %s151
      %p153 = scmp.eq.s32.totalorder %s22, 0
      %p154 = por %p152, %p153
      %s156 = sadd.s32 %s155, 1
      %p159 = scmp.eq.s32.totalorder %s16, 1
      %p160 = scmp.ne.s32.totalorder %s155, %s157
      %p161 = scmp.eq.s32.totalorder %s16, 0
      %p162 = por %p160, %p161
      %p163 = scmp.ne.s32.totalorder %s155, %s157
      %p164 = scmp.eq.s32.totalorder %s21, 1
      %p165 = por %p163, %p164
      %p166 = scmp.ne.s32.totalorder %s157, %s158
      %p167 = scmp.eq.s32.totalorder %s21, 0
      %p168 = por %p166, %p167
      %p169 = scmp.ne.s32.totalorder %s157, %s158
      %p170 = scmp.eq.s32.totalorder %s22, 1
      %p171 = por %p169, %p170
      %p173 = scmp.ne.s32.totalorder %s158, %s172
      %p174 = scmp.eq.s32.totalorder %s22, 0
      %p175 = por %p173, %p174
      %s176 = ssub.s32 %s16, %s23
      %p177 = scmp.eq.s32.totalorder %s176, 0
      %s179 = sadd.s32 %s178, 1
      %s180 = scalar_select %p177, %s178, %s179
      %p183 = pneg %p177
      %p184 = scmp.eq.s32.totalorder %s16, 1
      %p185 = por %p183, %p184
      %p186 = scmp.ne.s32.totalorder %s178, %s181
      %p187 = scmp.eq.s32.totalorder %s16, 0
      %p188 = por %p186, %p187
      %p189 = scmp.ne.s32.totalorder %s178, %s181
      %p190 = scmp.eq.s32.totalorder %s21, 1
      %p191 = por %p189, %p190
      %p192 = scmp.ne.s32.totalorder %s181, %s182
      %p193 = scmp.eq.s32.totalorder %s21, 0
      %p194 = por %p192, %p193
      %p195 = scmp.ne.s32.totalorder %s181, %s182
      %p196 = scmp.eq.s32.totalorder %s22, 1
      %p197 = por %p195, %p196
      %p199 = scmp.ne.s32.totalorder %s182, %s198
      %p200 = scmp.eq.s32.totalorder %s22, 0
      %p201 = por %p199, %p200
      %p202 = scmp.le.s32.totalorder 1, %s16
      %p203 = scmp.lt.s32.totalorder %s16, 3
      %p204 = pnand %p202, %p203
      %p205 = pneg %p204
      // Predicated region
      $region9: #{mlp_forward.1} parent=5 // pred_check
        _
      $region10: #{mlp_forward.1} parent=5 // pred_check_branch
        %207 = sbr.rel (%p204) target = $region12
      $region11: #{mlp_forward.1} parent=5 // pred_region
        %s208 = ssub.s32 %s16, 1
        // Predicated region
        $region13: #{mlp_forward.1} parent=11 // pred_check
          %p209 = pneg %p63
        $region14: #{mlp_forward.1} parent=11 // pred_check_branch
          %211 = sbr.rel (%p209) target = $region16
        $region15: #{mlp_forward.1} parent=11 // pred_region
          _
        $region16: #{mlp_forward.1} parent=11 // pred_fallthru
          _
        // Predicated region
        $region17: #{mlp_forward.1} parent=11 // pred_check
          %p212 = pneg %p84
        $region18: #{mlp_forward.1} parent=11 // pred_check_branch
          %214 = sbr.rel (%p212) target = $region20
        $region19: #{mlp_forward.1} parent=11 // pred_region
          _
        $region20: #{mlp_forward.1} parent=11 // pred_fallthru
          _
        // Predicated region
        $region21: #{mlp_forward.1} parent=11 // pred_check
          %p215 = pneg %p105
        $region22: #{mlp_forward.1} parent=11 // pred_check_branch
          %217 = sbr.rel (%p215) target = $region24
        $region23: #{mlp_forward.1} parent=11 // pred_region
          _
        $region24: #{mlp_forward.1} parent=11 // pred_fallthru
          _
        // Predicated region
        $region25: #{mlp_forward.1} parent=11 // pred_check
          %p218 = pneg %p126
        $region26: #{mlp_forward.1} parent=11 // pred_check_branch
          %220 = sbr.rel (%p218) target = $region28
        $region27: #{mlp_forward.1} parent=11 // pred_region
          _
        $region28: #{mlp_forward.1} parent=11 // pred_fallthru
          _
        // Predicated region
        $region29: #{mlp_forward.1} parent=11 // pred_check
          %p221 = pneg %p147
        $region30: #{mlp_forward.1} parent=11 // pred_check_branch
          %223 = sbr.rel (%p221) target = $region32
        $region31: #{mlp_forward.1} parent=11 // pred_region
          _
        $region32: #{mlp_forward.1} parent=11 // pred_fallthru
          _
        // Predicated region
        $region33: #{mlp_forward.1} parent=11 // pred_check
          %p224 = pneg %p168
        $region34: #{mlp_forward.1} parent=11 // pred_check_branch
          %226 = sbr.rel (%p224) target = $region36
        $region35: #{mlp_forward.1} parent=11 // pred_region
          _
        $region36: #{mlp_forward.1} parent=11 // pred_fallthru
          _
      $region12: #{mlp_forward.1} parent=5 // pred_fallthru
        _
      %p227 = scmp.lt.s32.totalorder %s16, 2
      // Predicated region
      $region37: #{mlp_forward.1} parent=5 // pred_check
        %p228 = pneg %p227
      $region38: #{mlp_forward.1} parent=5 // pred_check_branch
        %230 = sbr.rel (%p228) target = $region40
      $region39: #{mlp_forward.1} parent=5 // pred_region
        // Predicated region
        $region41: #{mlp_forward.1} parent=39 // pred_check
          %p231 = pneg %p36
        $region42: #{mlp_forward.1} parent=39 // pred_check_branch
          %233 = sbr.rel (%p231) target = $region44
        $region43: #{mlp_forward.1} parent=39 // pred_region
          %s234 = sand.u32 %s26, 1
          %s235 = sand.u32 %s26, 1
          %s236 = smul.addr %s235, 16
          %s237 = scalar_lea.vmem [#allocation2], %s236
          %s238 = smul.addr %s16, 8
          %s239 = scalar_lea.vmem %s0, %s238
          // Predicated region
          $region45: #{mlp_forward.1} parent=43 // pred_check
            _
          $region46: #{mlp_forward.1} parent=43 // pred_check_branch
            %241 = sbr.rel (0) target = $region48
          $region47: #{mlp_forward.1} parent=43 // pred_region
            // Predicated region
            $region49: #{mlp_forward.1} parent=47 // pred_check
              _
            $region50: #{mlp_forward.1} parent=47 // pred_check_branch
              %243 = sbr.rel (0) target = $region52
            $region51: #{mlp_forward.1} parent=47 // pred_region
              // Predicated region
              $region64: #{mlp_forward.1} parent=51 // pred_check
                _
              $region65: #{mlp_forward.1} parent=51 // pred_check_branch
                %260 = sbr.rel (0) target = $region67
              $region66: #{mlp_forward.1} parent=51 // pred_region
                loop: start=0, step=1, limit=1
                $region68: #{mlp_forward.1} parent=66 // loop_pre_header
                  _
                $region69: #{mlp_forward.1} parent=66 // loop_header
                  %s262 = sphi 0, %s266
                  %p263 = scmp.ge.s32.totalorder %s262, 1
                  %s267 = sphi %s239, %s239
                  %s268 = sphi %s237, %s237
                $region70: #{mlp_forward.1} parent=66 // loop_header_branch
                  %265 = sbr.rel (%p263) target = $region74
                $region71: #{mlp_forward.1} parent=66 // loop_body
                  %v269 = vld [vmem:[%s267] sm:$0xff]
                  %270 = vst [vmem:[%s268] sm:$0xff] %v269
                  %v271 = vld [vmem:[%s267 + $0x10] sm:$0xff]
                  %272 = vst [vmem:[%s268 + $0x8] sm:$0xff] %v271
                $region72: #{mlp_forward.1} parent=66 // loop_footer
                  %s266 = sadd.s32 1, %s262
                $region73: #{mlp_forward.1} parent=66 // loop_footer_branch
                  %261 = sbr.rel target = $region69
                $region74: #{mlp_forward.1} parent=66 // loop_exit
                  _
              $region67: #{mlp_forward.1} parent=51 // pred_fallthru
                _
              // Predicated region
              $region75: #{mlp_forward.1} parent=51 // pred_check
                _
              $region76: #{mlp_forward.1} parent=51 // pred_check_branch
                %274 = sbr.rel target = $region78
              $region77: #{mlp_forward.1} parent=51 // pred_region
                _
              $region78: #{mlp_forward.1} parent=51 // pred_fallthru
                _
            $region52: #{mlp_forward.1} parent=47 // pred_fallthru
              _
            // Predicated region
            $region53: #{mlp_forward.1} parent=47 // pred_check
              _
            $region54: #{mlp_forward.1} parent=47 // pred_check_branch
              %245 = sbr.rel target = $region56
            $region55: #{mlp_forward.1} parent=47 // pred_region
              loop: start=0, step=1, limit=1
              $region57: #{mlp_forward.1} parent=55 // loop_pre_header
                _
              $region58: #{mlp_forward.1} parent=55 // loop_header
                %s248 = sphi 0, %s252
                %p249 = scmp.ge.s32.totalorder %s248, 1
                %s253 = sphi %s239, %s239
                %s254 = sphi %s237, %s237
              $region59: #{mlp_forward.1} parent=55 // loop_header_branch
                %251 = sbr.rel (%p249) target = $region63
              $region60: #{mlp_forward.1} parent=55 // loop_body
                %v255 = vld [vmem:[%s253] sm:$0xff]
                %256 = vst [vmem:[%s254] sm:$0xff] %v255
                %v257 = vld [vmem:[%s253 + $0x10] sm:$0xff]
                %258 = vst [vmem:[%s254 + $0x8] sm:$0xff] %v257
              $region61: #{mlp_forward.1} parent=55 // loop_footer
                %s252 = sadd.s32 1, %s248
              $region62: #{mlp_forward.1} parent=55 // loop_footer_branch
                %247 = sbr.rel target = $region58
              $region63: #{mlp_forward.1} parent=55 // loop_exit
                _
            $region56: #{mlp_forward.1} parent=47 // pred_fallthru
              _
          $region48: #{mlp_forward.1} parent=43 // pred_fallthru
            _
          %275 = vnop
        $region44: #{mlp_forward.1} parent=39 // pred_fallthru
          _
      $region40: #{mlp_forward.1} parent=5 // pred_fallthru
        _
      %p276 = scmp.le.s32.totalorder 1, %s16
      %p277 = scmp.lt.s32.totalorder %s16, 3
      %p278 = pnand %p276, %p277
      %p279 = pneg %p278
      // Predicated region
      $region79: #{mlp_forward.1} parent=5 // pred_check
        _
      $region80: #{mlp_forward.1} parent=5 // pred_check_branch
        %281 = sbr.rel (%p278) target = $region82
      $region81: #{mlp_forward.1} parent=5 // pred_region
        %s282 = ssub.s32 %s16, 1
        %s283 = sand.u32 %s29, 1
        %s284 = sand.u32 %s29, 1
        %s285 = smul.addr %s284, 16
        %s286 = scalar_lea.vmem [#allocation2], %s285
        // Predicated region
        $region83: #{mlp_forward.1} parent=81 // pred_check
          %p287 = pneg %p42
        $region84: #{mlp_forward.1} parent=81 // pred_check_branch
          %289 = sbr.rel (%p287) target = $region86
        $region85: #{mlp_forward.1} parent=81 // pred_region
          _
        $region86: #{mlp_forward.1} parent=81 // pred_fallthru
          _
        %s290 = sand.u32 %s29, 1
        %s291 = sand.u32 %s29, 1
        %s292 = smul.addr %s291, 16
        %s293 = scalar_lea.vmem [#allocation2], %s292
        %p294 = pneg %p42
        %p295 = pneg %p39
        %p296 = pneg %p63
        %p297 = pneg %p60
        %p298 = pneg %p84
        %p299 = pneg %p81
        %p300 = pneg %p105
        %p301 = pneg %p102
        %p302 = pneg %p126
        %p303 = pneg %p123
        %p304 = pneg %p147
        %p305 = pneg %p144
        %p306 = pneg %p168
        %p307 = pneg %p165
        %p308 = pneg %p194
        %p309 = pneg %p191
        %s310 = sand.u32 %s181, 1
        %s311 = scalar_lea.sflag [#allocation4], %s310
        %s312 = sand.u32 %s181, 1
        %s313 = smul.addr %s312, 4
        %s314 = scalar_lea.vmem [#allocation3], %s313
        %v315 = vld [vmem:[%s286] sm:$0xff]
        %v316 = vld [vmem:[%s286 + $0x8] sm:$0x1]
        %v317 = vld [vmem:[%s1] sm:$0xff]
        %v318 = vld [vmem:[%s1 + $0x8] sm:$0xff]
        %v319 = vld [vmem:[%s1 + $0x10] sm:$0xff]
        %v320 = vld [vmem:[%s1 + $0x18] sm:$0xff]
        %v321 = vld [vmem:[%s2] sm:$0xff]
        %v322 = vld [vmem:[%s2 + $0x8] sm:$0xff]
        %v323 = vld [vmem:[%s2 + $0x10] sm:$0xff]
        %v324 = vld [vmem:[%s2 + $0x18] sm:$0xff]
        %326 = vset.pattern.permute.xlu0 0
        %327 = vperm.xlu0 %326, %v321
        %v328 = vpop.permute.xlu0 %327
        %331 = vset.pattern.permute.xlu0 0
        %332 = vperm.xlu0 %331, %v322
        %v333 = vpop.permute.xlu0 %332
        %336 = vset.pattern.permute.xlu0 0
        %337 = vperm.xlu0 %336, %v323
        %v338 = vpop.permute.xlu0 %337
        %341 = vset.pattern.permute.xlu0 0
        %342 = vperm.xlu0 %341, %v324
        %v343 = vpop.permute.xlu0 %342
        %vm345 = vcmask 72704
        %v347 = vsel %vm345, %v317, 0
        %v350 = vsel %vm345, %v318, 0
        %v353 = vsel %vm345, %v319, 0
        %v356 = vsel %vm345, %v320, 0
        %vm358 = vcmask 1040384
        %v360 = vsel %vm358, %v316, 0
        %362 = vmatprep.subr.mxu0 0.0
        %363 = vmatpush1.msra.mxu0 %v315
        %364 = vmatprep.subr.mxu0 0.0
        %365 = vmatpush1.msra.mxu0 %v360
        %366 = vmatprep.subr.mxu0 0.0
        %367 = vmatpush1.msra.mxu0 0.0
        %368 = vmatprep.subr.mxu0 0.0
        %369 = vmatpush1.msra.mxu0 0.0
        %370 = vmatprep.subr.mxu0 0.0
        %371 = vmatpush1.msra.mxu0 0.0
        %372 = vmatprep.subr.mxu0 0.0
        %373 = vmatpush1.msra.mxu0 0.0
        %374 = vmatprep.subr.mxu0 0.0
        %375 = vmatpush1.msra.mxu0 0.0
        %376 = vmatprep.subr.mxu0 0.0
        %377 = vmatpush1.msra.mxu0 0.0
        %378 = vmatprep.subr.mxu0 0.0
        %379 = vmatpush1.msra.mxu0 0.0
        %380 = vmatprep.subr.mxu0 0.0
        %381 = vmatpush1.msra.mxu0 0.0
        %382 = vmatprep.subr.mxu0 0.0
        %383 = vmatpush1.msra.mxu0 0.0
        %384 = vmatprep.subr.mxu0 0.0
        %385 = vmatpush1.msra.mxu0 0.0
        %386 = vmatprep.subr.mxu0 0.0
        %387 = vmatpush1.msra.mxu0 0.0
        %388 = vmatprep.subr.mxu0 0.0
        %389 = vmatpush1.msra.mxu0 0.0
        %390 = vmatprep.subr.mxu0 0.0
        %391 = vmatpush1.msra.mxu0 0.0
        %392 = vmatprep.subr.mxu0 0.0
        %393 = vmatpush1.msra.mxu0 0.0
        %394 = vmatprep.subr.mxu0 0.0
        %395 = vmatpush1.msra.mxu0 0.0
        %396 = vmatprep.subr.mxu0 0.0
        %397 = vmatpush1.msra.mxu0 0.0
        %398 = vmatprep.subr.mxu0 0.0
        %399 = vmatpush1.msra.mxu0 0.0
        %400 = vmatprep.subr.mxu0 0.0
        %401 = vmatpush1.msra.mxu0 0.0
        %402 = vmatprep.subr.mxu0 0.0
        %403 = vmatpush1.msra.mxu0 0.0
        %404 = vmatprep.subr.mxu0 0.0
        %405 = vmatpush1.msra.mxu0 0.0
        %406 = vmatprep.subr.mxu0 0.0
        %407 = vmatpush1.msra.mxu0 0.0
        %408 = vmatprep.subr.mxu0 0.0
        %409 = vmatpush1.msra.mxu0 0.0
        %410 = vmatprep.subr.mxu0 0.0
        %411 = vmatpush1.msra.mxu0 0.0
        %412 = vmatprep.subr.mxu0 0.0
        %413 = vmatpush1.msra.mxu0 0.0
        %414 = vmatprep.subr.mxu0 0.0
        %415 = vmatpush1.msra.mxu0 0.0
        %416 = vmatprep.subr.mxu0 0.0
        %417 = vmatpush1.msra.mxu0 0.0
        %418 = vmatprep.subr.mxu0 0.0
        %419 = vmatpush1.msra.mxu0 0.0
        %420 = vmatprep.subr.mxu0 0.0
        %421 = vmatpush1.msra.mxu0 0.0
        %422 = vmatprep.subr.mxu0 0.0
        %423 = vmatpush1.msra.mxu0 0.0
        %424 = vmatprep.subr.mxu0 0.0
        %425 = vmatpush1.msra.mxu0 0.0
        %426 = vmatprep.mubr.f32.mxu0 0.0
        %427 = vmatmul.mubr.f32.gmra.mrb[0].mxu0 %v347
        %v428 = vpop.f32.mrb[0].mxu0
        %v429 = vadd.f32 %v328, %v428
        %v430 = vpop.f32.mrb[0].mxu0
        %431 = vmatprep.mubr.f32.mxu0 0.0
        %432 = vmatmul.mubr.f32.gmra.mrb[0].mxu0 %v350
        %v433 = vpop.f32.mrb[0].mxu0
        %v434 = vadd.f32 %v333, %v433
        %v435 = vpop.f32.mrb[0].mxu0
        %436 = vmatprep.mubr.f32.mxu0 0.0
        %437 = vmatmul.mubr.f32.gmra.mrb[0].mxu0 %v353
        %v438 = vpop.f32.mrb[0].mxu0
        %v439 = vadd.f32 %v338, %v438
        %v440 = vpop.f32.mrb[0].mxu0
        %441 = vmatprep.mubr.f32.mxu0 0.0
        %442 = vmatmul.mubr.f32.gmra.mrb[0].mxu0 %v356
        %v443 = vpop.f32.mrb[0].mxu0
        %v444 = vadd.f32 %v343, %v443
        %v445 = vpop.f32.mrb[0].mxu0
        %446 = vdwg.mxu0
        %v447 = vmax.f32 %v429, 0.0
        %v448 = vmax.f32 %v434, 0.0
        %v449 = vmax.f32 %v439, 0.0
        %v450 = vmax.f32 %v444, 0.0
        %v451 = vld [vmem:[%s3] sm:$0xff]
        %v452 = vld [vmem:[%s3 + $0x8] sm:$0xff]
        %v453 = vld [vmem:[%s3 + $0x10] sm:$0xff]
        %v454 = vld [vmem:[%s3 + $0x18] sm:$0xff]
        %v455 = vld [vmem:[%s4] sm:$0xff]
        %v456 = vld [vmem:[%s4 + $0x8] sm:$0xff]
        %v457 = vld [vmem:[%s4 + $0x10] sm:$0xff]
        %v458 = vld [vmem:[%s4 + $0x18] sm:$0xff]
        %460 = vset.pattern.permute.xlu0 0
        %461 = vperm.xlu0 %460, %v455
        %v462 = vpop.permute.xlu0 %461
        %465 = vset.pattern.permute.xlu0 0
        %466 = vperm.xlu0 %465, %v456
        %v467 = vpop.permute.xlu0 %466
        %470 = vset.pattern.permute.xlu0 0
        %471 = vperm.xlu0 %470, %v457
        %v472 = vpop.permute.xlu0 %471
        %475 = vset.pattern.permute.xlu0 0
        %476 = vperm.xlu0 %475, %v458
        %v477 = vpop.permute.xlu0 %476
        %vm479 = vcmask 261120
        %v481 = vsel %vm479, %v451, 0
        %v484 = vsel %vm479, %v452, 0
        %v487 = vsel %vm479, %v453, 0
        %v490 = vsel %vm479, %v454, 0
        %492 = vmatprep.subr.mxu0 0.0
        %493 = vmatpush1.msra.mxu0 %v447
        %494 = vmatprep.subr.mxu0 0.0
        %495 = vmatpush1.msra.mxu0 %v448
        %496 = vmatprep.subr.mxu0 0.0
        %497 = vmatpush1.msra.mxu0 %v449
        %498 = vmatprep.subr.mxu0 0.0
        %499 = vmatpush1.msra.mxu0 %v450
        %500 = vmatprep.subr.mxu0 0.0
        %501 = vmatpush1.msra.mxu0 0.0
        %502 = vmatprep.subr.mxu0 0.0
        %503 = vmatpush1.msra.mxu0 0.0
        %504 = vmatprep.subr.mxu0 0.0
        %505 = vmatpush1.msra.mxu0 0.0
        %506 = vmatprep.subr.mxu0 0.0
        %507 = vmatpush1.msra.mxu0 0.0
        %508 = vmatprep.subr.mxu0 0.0
        %509 = vmatpush1.msra.mxu0 0.0
        %510 = vmatprep.subr.mxu0 0.0
        %511 = vmatpush1.msra.mxu0 0.0
        %512 = vmatprep.subr.mxu0 0.0
        %513 = vmatpush1.msra.mxu0 0.0
        %514 = vmatprep.subr.mxu0 0.0
        %515 = vmatpush1.msra.mxu0 0.0
        %516 = vmatprep.subr.mxu0 0.0
        %517 = vmatpush1.msra.mxu0 0.0
        %518 = vmatprep.subr.mxu0 0.0
        %519 = vmatpush1.msra.mxu0 0.0
        %520 = vmatprep.subr.mxu0 0.0
        %521 = vmatpush1.msra.mxu0 0.0
        %522 = vmatprep.subr.mxu0 0.0
        %523 = vmatpush1.msra.mxu0 0.0
        %524 = vmatprep.subr.mxu0 0.0
        %525 = vmatpush1.msra.mxu0 0.0
        %526 = vmatprep.subr.mxu0 0.0
        %527 = vmatpush1.msra.mxu0 0.0
        %528 = vmatprep.subr.mxu0 0.0
        %529 = vmatpush1.msra.mxu0 0.0
        %530 = vmatprep.subr.mxu0 0.0
        %531 = vmatpush1.msra.mxu0 0.0
        %532 = vmatprep.subr.mxu0 0.0
        %533 = vmatpush1.msra.mxu0 0.0
        %534 = vmatprep.subr.mxu0 0.0
        %535 = vmatpush1.msra.mxu0 0.0
        %536 = vmatprep.subr.mxu0 0.0
        %537 = vmatpush1.msra.mxu0 0.0
        %538 = vmatprep.subr.mxu0 0.0
        %539 = vmatpush1.msra.mxu0 0.0
        %540 = vmatprep.subr.mxu0 0.0
        %541 = vmatpush1.msra.mxu0 0.0
        %542 = vmatprep.subr.mxu0 0.0
        %543 = vmatpush1.msra.mxu0 0.0
        %544 = vmatprep.subr.mxu0 0.0
        %545 = vmatpush1.msra.mxu0 0.0
        %546 = vmatprep.subr.mxu0 0.0
        %547 = vmatpush1.msra.mxu0 0.0
        %548 = vmatprep.subr.mxu0 0.0
        %549 = vmatpush1.msra.mxu0 0.0
        %550 = vmatprep.subr.mxu0 0.0
        %551 = vmatpush1.msra.mxu0 0.0
        %552 = vmatprep.subr.mxu0 0.0
        %553 = vmatpush1.msra.mxu0 0.0
        %554 = vmatprep.subr.mxu0 0.0
        %555 = vmatpush1.msra.mxu0 0.0
        %556 = vmatprep.mubr.f32.mxu0 0.0
        %557 = vmatmul.mubr.f32.gmra.mrb[0].mxu0 %v481
        %v558 = vpop.f32.mrb[0].mxu0
        %v559 = vadd.f32 %v462, %v558
        %v560 = vpop.f32.mrb[0].mxu0
        %561 = vmatprep.mubr.f32.mxu0 0.0
        %562 = vmatmul.mubr.f32.gmra.mrb[0].mxu0 %v484
        %v563 = vpop.f32.mrb[0].mxu0
        %v564 = vadd.f32 %v467, %v563
        %v565 = vpop.f32.mrb[0].mxu0
        %566 = vmatprep.mubr.f32.mxu0 0.0
        %567 = vmatmul.mubr.f32.gmra.mrb[0].mxu0 %v487
        %v568 = vpop.f32.mrb[0].mxu0
        %v569 = vadd.f32 %v472, %v568
        %v570 = vpop.f32.mrb[0].mxu0
        %571 = vmatprep.mubr.f32.mxu0 0.0
        %572 = vmatmul.mubr.f32.gmra.mrb[0].mxu0 %v490
        %v573 = vpop.f32.mrb[0].mxu0
        %v574 = vadd.f32 %v477, %v573
        %v575 = vpop.f32.mrb[0].mxu0
        %576 = vdwg.mxu0
        %v577 = vmax.f32 %v559, 0.0
        %v578 = vmax.f32 %v564, 0.0
        %v579 = vmax.f32 %v569, 0.0
        %v580 = vmax.f32 %v574, 0.0
        %v581 = vld [vmem:[%s5] sm:$0x7]
        %v582 = vld [vmem:[%s6] sm:$0x7]
        %584 = vset.pattern.permute.xlu0 0
        %585 = vperm.xlu0 %584, %v582
        %v586 = vpop.permute.xlu0 %585
        %v589 = vsel %vm479, %v581, 0
        %591 = vmatprep.subr.mxu0 0.0
        %592 = vmatpush1.msra.mxu0 %v577
        %593 = vmatprep.subr.mxu0 0.0
        %594 = vmatpush1.msra.mxu0 %v578
        %595 = vmatprep.subr.mxu0 0.0
        %596 = vmatpush1.msra.mxu0 %v579
        %597 = vmatprep.subr.mxu0 0.0
        %598 = vmatpush1.msra.mxu0 %v580
        %599 = vmatprep.subr.mxu0 0.0
        %600 = vmatpush1.msra.mxu0 0.0
        %601 = vmatprep.subr.mxu0 0.0
        %602 = vmatpush1.msra.mxu0 0.0
        %603 = vmatprep.subr.mxu0 0.0
        %604 = vmatpush1.msra.mxu0 0.0
        %605 = vmatprep.subr.mxu0 0.0
        %606 = vmatpush1.msra.mxu0 0.0
        %607 = vmatprep.subr.mxu0 0.0
        %608 = vmatpush1.msra.mxu0 0.0
        %609 = vmatprep.subr.mxu0 0.0
        %610 = vmatpush1.msra.mxu0 0.0
        %611 = vmatprep.subr.mxu0 0.0
        %612 = vmatpush1.msra.mxu0 0.0
        %613 = vmatprep.subr.mxu0 0.0
        %614 = vmatpush1.msra.mxu0 0.0
        %615 = vmatprep.subr.mxu0 0.0
        %616 = vmatpush1.msra.mxu0 0.0
        %617 = vmatprep.subr.mxu0 0.0
        %618 = vmatpush1.msra.mxu0 0.0
        %619 = vmatprep.subr.mxu0 0.0
        %620 = vmatpush1.msra.mxu0 0.0
        %621 = vmatprep.subr.mxu0 0.0
        %622 = vmatpush1.msra.mxu0 0.0
        %623 = vmatprep.subr.mxu0 0.0
        %624 = vmatpush1.msra.mxu0 0.0
        %625 = vmatprep.subr.mxu0 0.0
        %626 = vmatpush1.msra.mxu0 0.0
        %627 = vmatprep.subr.mxu0 0.0
        %628 = vmatpush1.msra.mxu0 0.0
        %629 = vmatprep.subr.mxu0 0.0
        %630 = vmatpush1.msra.mxu0 0.0
        %631 = vmatprep.subr.mxu0 0.0
        %632 = vmatpush1.msra.mxu0 0.0
        %633 = vmatprep.subr.mxu0 0.0
        %634 = vmatpush1.msra.mxu0 0.0
        %635 = vmatprep.subr.mxu0 0.0
        %636 = vmatpush1.msra.mxu0 0.0
        %637 = vmatprep.subr.mxu0 0.0
        %638 = vmatpush1.msra.mxu0 0.0
        %639 = vmatprep.subr.mxu0 0.0
        %640 = vmatpush1.msra.mxu0 0.0
        %641 = vmatprep.subr.mxu0 0.0
        %642 = vmatpush1.msra.mxu0 0.0
        %643 = vmatprep.subr.mxu0 0.0
        %644 = vmatpush1.msra.mxu0 0.0
        %645 = vmatprep.subr.mxu0 0.0
        %646 = vmatpush1.msra.mxu0 0.0
        %647 = vmatprep.subr.mxu0 0.0
        %648 = vmatpush1.msra.mxu0 0.0
        %649 = vmatprep.subr.mxu0 0.0
        %650 = vmatpush1.msra.mxu0 0.0
        %651 = vmatprep.subr.mxu0 0.0
        %652 = vmatpush1.msra.mxu0 0.0
        %653 = vmatprep.subr.mxu0 0.0
        %654 = vmatpush1.msra.mxu0 0.0
        %655 = vmatprep.mubr.f32.mxu0 0.0
        %656 = vmatmul.mubr.f32.gmra.mrb[0].mxu0 %v589
        %v657 = vpop.f32.mrb[0].mxu0
        %v658 = vadd.f32 %v586, %v657
        %v659 = vpop.f32.mrb[0].mxu0
        %660 = vdwg.mxu0
        %v661 = vtanh.pop %v658
        %662 = vst [vmem:[%s314] sm:$0x7] %v661
        %s663 = sand.u32 %s181, 1
        %s664 = scalar_lea.sflag [#allocation4], %s663
        %s665 = sand.u32 %s181, 1
        %s666 = smul.addr %s665, 4
        %s667 = scalar_lea.vmem [#allocation3], %s666
        // Predicated region
        $region87: #{mlp_forward.1} parent=81 // pred_check
          %p668 = pneg %p191
        $region88: #{mlp_forward.1} parent=81 // pred_check_branch
          %670 = sbr.rel (%p668) target = $region90
        $region89: #{mlp_forward.1} parent=81 // pred_region
          %s672 = ssub.s32 64, 64
          %673 = vsyncadd %s664, %s672
          %s674 = smul.addr %s21, 64
          %s675 = scalar_lea.hbm %s7, %s674
          %s677 = sshll.u32 %s667, 4
          %s678 = int_to_ptr.vmem [resolvable:$true] %s677
          %680 = dma.vmem_to_hbm [thread:$0]  %s678, 64, %s675, %s664
        $region90: #{mlp_forward.1} parent=81 // pred_fallthru
          _
      $region82: #{mlp_forward.1} parent=5 // pred_fallthru
        _
      %p681 = scmp.le.s32.totalorder 2, %s16
      // Predicated region
      $region91: #{mlp_forward.1} parent=5 // pred_check
        %p682 = pneg %p681
      $region92: #{mlp_forward.1} parent=5 // pred_check_branch
        %684 = sbr.rel (%p682) target = $region94
      $region93: #{mlp_forward.1} parent=5 // pred_region
        %s685 = ssub.s32 %s16, 2
        // Predicated region
        $region95: #{mlp_forward.1} parent=93 // pred_check
          %p686 = pneg %p197
        $region96: #{mlp_forward.1} parent=93 // pred_check_branch
          %688 = sbr.rel (%p686) target = $region98
        $region97: #{mlp_forward.1} parent=93 // pred_region
          %s689 = sand.u32 %s182, 1
          %s690 = scalar_lea.sflag [#allocation4], %s689
          %s691 = sand.u32 %s182, 1
          %s692 = smul.addr %s691, 4
          %s693 = scalar_lea.vmem [#allocation3], %s692
          %694 = dma.done %s690, 64
        $region98: #{mlp_forward.1} parent=93 // pred_fallthru
          _
      $region94: #{mlp_forward.1} parent=5 // pred_fallthru
        _
    $region6: #{mlp_forward.1} parent=1 // loop_footer
      %s20 = sadd.s32 1, %s16
    $region7: #{mlp_forward.1} parent=1 // loop_footer_branch
      %15 = sbr.rel target = $region3
    $region8: #{mlp_forward.1} parent=1 // loop_exit
      _
    %695 = vsyncpa [#allocation4], 1
    %s696 = scalar_lea.sflag [#allocation4], 1
    %697 = vsyncpa %s696, 1

</llo_original>
